<compile_context>
chip_gen: v7x
topology: tpu7x:2x2x1
jax: 0.10.0
libtpu: 0.0.40
codegen_flags: <defaults>
</compile_context>

<pallas_src>
import functools

import jax
import jax.numpy as jnp
from jax.experimental import pallas as pl
from jax.experimental.pallas import tpu as pltpu


def _choose_row_tile(n: int, target: int = 512) -> int:
    """Largest row tile that evenly divides n: full n if small, else a multiple of 8."""
    if n <= target:
        return n
    start = target - (target % 8)
    for t in range(start, 0, -8):
        if n % t == 0:
            return t
    return n  # no multiple-of-8 divisor -> fall back to a single block over all rows


def _make_dropout_kernel(keep_prob: float):
    inv_keep = float(1.0 / keep_prob)
    # keep  <=>  top 24 bits of the uint32 draw  <  keep_prob * 2^24
    threshold = min(int(keep_prob * (1 << 24)), 1 << 24)

    def kernel(s_ref, sbits_ref, v_ref, vbits_ref, so_ref, vo_ref):
        thr = jnp.uint32(threshold)

        # ---- scalar-channel dropout (pure elementwise) ----
        keep_s = (sbits_ref[...] >> 8) < thr                             # (tile, ns)
        scale_s = jnp.where(keep_s, inv_keep, 0.0).astype(jnp.float32)
        so_ref[...] = (s_ref[...] * scale_s).astype(so_ref.dtype)

        # ---- vector-channel dropout: one draw per (row, channel), broadcast over xyz ----
        keep_v = (vbits_ref[...] >> 8) < thr                             # (tile, nv)
        scale_v = jnp.where(keep_v, inv_keep, 0.0).astype(jnp.float32)
        tile, nv = vbits_ref.shape
        scale_full = jnp.broadcast_to(scale_v[:, :, None],
                                      (tile, nv, 3)).reshape(tile, nv * 3)
        vo_ref[...] = (v_ref[...] * scale_full).astype(vo_ref.dtype)

    return kernel


@functools.partial(jax.jit, static_argnames=("drop_rate", "training", "row_tile"))
def dropout_forward(s, v, key, *, drop_rate: float, training: bool = True,
                    row_tile: int = 512):
    """Forward pass of Dropout((s, V)).

    s: (N, ns) scalar channels.   v: (N, nv, 3) vector channels.
    """
    if (not training) or drop_rate == 0.0:
        return s, v
    if drop_rate >= 1.0:                       # guard: avoid 1/(1-p) blowing up
        return jnp.zeros_like(s), jnp.zeros_like(v)

    keep_prob = 1.0 - drop_rate
    n, ns = s.shape
    nv = v.shape[1]
    assert v.shape == (n, nv, 3)

    # lane-dense flat view of v; contiguous, so the reshape is free
    v_flat = v.reshape(n, nv * 3)

    ks, kv = jax.random.split(key)
    sbits = jax.random.bits(ks, (n, ns), dtype=jnp.uint32)   # per-element draws for s
    vbits = jax.random.bits(kv, (n, nv), dtype=jnp.uint32)   # per-channel draws for v

    tile = _choose_row_tile(n, row_tile)
    grid = (n // tile,)
    row_map = lambda i: (i, 0)

    s_out, v_out_flat = pl.pallas_call(
        _make_dropout_kernel(keep_prob),
        out_shape=(jax.ShapeDtypeStruct((n, ns), s.dtype),
                   jax.ShapeDtypeStruct((n, nv * 3), v.dtype)),
        grid=grid,
        in_specs=[pl.BlockSpec((tile, ns), row_map),
                  pl.BlockSpec((tile, ns), row_map),
                  pl.BlockSpec((tile, nv * 3), row_map),
                  pl.BlockSpec((tile, nv), row_map)],
        out_specs=(pl.BlockSpec((tile, ns), row_map),
                   pl.BlockSpec((tile, nv * 3), row_map)),
        compiler_params=pltpu.CompilerParams(
            dimension_semantics=("parallel",)),
    )(s, sbits, v_flat, vbits)

    return s_out, v_out_flat.reshape(n, nv, 3)


if __name__ == "__main__":
    import numpy as np

    key = jax.random.PRNGKey(0)
    k_s, k_v, k_drop = jax.random.split(key, 3)

    N, NS, NV = 8, 32, 16
    drop_rate = 0.2
    keep_prob = 1.0 - drop_rate

    s = jax.random.normal(k_s, (N, NS), dtype=jnp.float32)
    v = jax.random.normal(k_v, (N, NV, 3), dtype=jnp.float32)

    s_out, v_out = dropout_forward(s, v, k_drop, drop_rate=drop_rate, training=True)
    jax.block_until_ready((s_out, v_out))

    # --- sanity checks on semantics ---
    s_np, so_np = np.asarray(s), np.asarray(s_out)
    v_np, vo_np = np.asarray(v), np.asarray(v_out)

    # scalar dropout: every element is either 0 or x / keep_prob
    ok_s = np.all(np.isclose(so_np, 0.0) | np.isclose(so_np, s_np / keep_prob, atol=1e-5))
    # vector dropout: each (n, c) channel is entirely zero or entirely scaled by 1/keep_prob
    zero_chan = np.all(np.isclose(vo_np, 0.0), axis=-1)
    kept_chan = np.all(np.isclose(vo_np, v_np / keep_prob, atol=1e-5), axis=-1)
    ok_v = np.all(zero_chan | kept_chan)

    # eval-mode passthrough
    s_eval, v_eval = dropout_forward(s, v, k_drop, drop_rate=drop_rate, training=False)
    ok_eval = (np.allclose(np.asarray(s_eval), s_np)
               and np.allclose(np.asarray(v_eval), v_np))

    assert ok_s, "scalar dropout semantics violated"
    assert ok_v, "vector-channel dropout semantics violated"
    assert ok_eval, "eval-mode passthrough violated"

    print("KERNEL_OK")
</pallas_src>

<mosaic_0001>
module attributes {stable_mosaic.version = 11 : i64} {
  func.func @kernel(%arg0: i32, %arg1: memref<8x32xf32, #tpu.memory_space<vmem>>, %arg2: memref<8x32xi32, #tpu.memory_space<vmem>>, %arg3: memref<8x48xf32, #tpu.memory_space<vmem>>, %arg4: memref<8x16xi32, #tpu.memory_space<vmem>>, %arg5: memref<8x32xf32, #tpu.memory_space<vmem>>, %arg6: memref<8x48xf32, #tpu.memory_space<vmem>>) attributes {dimension_semantics = [#tpu.dimension_semantics<parallel>], iteration_bounds = array<i64: 1>, scalar_prefetch = 0 : i64, scratch_operands = 0 : i64, tpu.core_type = #tpu.core_type<tc>, window_params = [{transform_indices = @transform_0, window_bounds = array<i64: 8, 32>}, {transform_indices = @transform_1, window_bounds = array<i64: 8, 32>}, {transform_indices = @transform_2, window_bounds = array<i64: 8, 48>}, {transform_indices = @transform_3, window_bounds = array<i64: 8, 16>}, {transform_indices = @transform_4, window_bounds = array<i64: 8, 32>}, {transform_indices = @transform_5, window_bounds = array<i64: 8, 48>}]} {
    %c0 = arith.constant 0 : index
    %c0_0 = arith.constant 0 : index
    %0 = vector.load %arg2[%c0, %c0_0] : memref<8x32xi32, #tpu.memory_space<vmem>>, vector<8x32xi32>
    %c8_i32 = arith.constant 8 : i32
    %1 = vector.broadcast %c8_i32 : i32 to vector<8x32xi32>
    %2 = arith.shrui %0, %1 : vector<8x32xi32>
    %c13421772_i32 = arith.constant 13421772 : i32
    %3 = vector.broadcast %c13421772_i32 : i32 to vector<8x32xi32>
    %4 = arith.cmpi ult, %2, %3 : vector<8x32xi32>
    %cst = arith.constant 1.250000e+00 : f32
    %cst_1 = arith.constant 0.000000e+00 : f32
    %5 = vector.broadcast %cst : f32 to vector<8x32xf32>
    %6 = vector.broadcast %cst_1 : f32 to vector<8x32xf32>
    %7 = arith.select %4, %5, %6 : vector<8x32xi1>, vector<8x32xf32>
    %c0_2 = arith.constant 0 : index
    %c0_3 = arith.constant 0 : index
    %8 = vector.load %arg1[%c0_2, %c0_3] : memref<8x32xf32, #tpu.memory_space<vmem>>, vector<8x32xf32>
    %9 = arith.mulf %8, %7 : vector<8x32xf32>
    %c0_4 = arith.constant 0 : index
    %c0_5 = arith.constant 0 : index
    %10 = vector.load %arg5[%c0_4, %c0_5] : memref<8x32xf32, #tpu.memory_space<vmem>>, vector<8x32xf32>
    tpu.vector_store %arg5[%c0_4, %c0_5], %9 {strides = array<i32>} : memref<8x32xf32, #tpu.memory_space<vmem>>, vector<8x32xf32>,
    %c0_6 = arith.constant 0 : index
    %c0_7 = arith.constant 0 : index
    %11 = vector.load %arg4[%c0_6, %c0_7] : memref<8x16xi32, #tpu.memory_space<vmem>>, vector<8x16xi32>
    %c8_i32_8 = arith.constant 8 : i32
    %12 = vector.broadcast %c8_i32_8 : i32 to vector<8x16xi32>
    %13 = arith.shrui %11, %12 : vector<8x16xi32>
    %c13421772_i32_9 = arith.constant 13421772 : i32
    %14 = vector.broadcast %c13421772_i32_9 : i32 to vector<8x16xi32>
    %15 = arith.cmpi ult, %13, %14 : vector<8x16xi32>
    %cst_10 = arith.constant 1.250000e+00 : f32
    %cst_11 = arith.constant 0.000000e+00 : f32
    %16 = vector.broadcast %cst_10 : f32 to vector<8x16xf32>
    %17 = vector.broadcast %cst_11 : f32 to vector<8x16xf32>
    %18 = arith.select %15, %16, %17 : vector<8x16xi1>, vector<8x16xf32>
    %19 = vector.shape_cast %18 : vector<8x16xf32> to vector<8x16x1xf32>
    %20 = vector.shape_cast %19 : vector<8x16x1xf32> to vector<8x16x1xf32>
    %21 = vector.broadcast %20 : vector<8x16x1xf32> to vector<8x16x3xf32>
    %22 = vector.shape_cast %21 : vector<8x16x3xf32> to vector<8x48xf32>
    %c0_12 = arith.constant 0 : index
    %c0_13 = arith.constant 0 : index
    %23 = vector.load %arg3[%c0_12, %c0_13] : memref<8x48xf32, #tpu.memory_space<vmem>>, vector<8x48xf32>
    %24 = arith.mulf %23, %22 : vector<8x48xf32>
    %c0_14 = arith.constant 0 : index
    %c0_15 = arith.constant 0 : index
    %25 = vector.load %arg6[%c0_14, %c0_15] : memref<8x48xf32, #tpu.memory_space<vmem>>, vector<8x48xf32>
    tpu.vector_store %arg6[%c0_14, %c0_15], %24 {strides = array<i32>} : memref<8x48xf32, #tpu.memory_space<vmem>>, vector<8x48xf32>,
    return
  }
  func.func @transform_0(%arg0: i32) -> (i32, i32) {
    %c0_i32 = arith.constant 0 : i32
    %c0_i32_0 = arith.constant 0 : i32
    return %arg0, %c0_i32 : i32, i32
  }
  func.func @transform_1(%arg0: i32) -> (i32, i32) {
    %c0_i32 = arith.constant 0 : i32
    %c0_i32_0 = arith.constant 0 : i32
    return %arg0, %c0_i32 : i32, i32
  }
  func.func @transform_2(%arg0: i32) -> (i32, i32) {
    %c0_i32 = arith.constant 0 : i32
    %c0_i32_0 = arith.constant 0 : i32
    return %arg0, %c0_i32 : i32, i32
  }
  func.func @transform_3(%arg0: i32) -> (i32, i32) {
    %c0_i32 = arith.constant 0 : i32
    %c0_i32_0 = arith.constant 0 : i32
    return %arg0, %c0_i32 : i32, i32
  }
  func.func @transform_4(%arg0: i32) -> (i32, i32) {
    %c0_i32 = arith.constant 0 : i32
    %c0_i32_0 = arith.constant 0 : i32
    return %arg0, %c0_i32 : i32, i32
  }
  func.func @transform_5(%arg0: i32) -> (i32, i32) {
    %c0_i32 = arith.constant 0 : i32
    %c0_i32_0 = arith.constant 0 : i32
    return %arg0, %c0_i32 : i32, i32
  }
}

</mosaic_0001>

<llo_original>
// kernel: dropout_forward.3
$region0: #{dropout_forward.3}
  #allocation0 [shape = 'u32[]', space=smem, size = 0x4, offset = 0x4, fixed_abs, tag = 'smem constant byte address 0x4 - core index']
  #allocation1 [shape = 'u32[144,128]{1,0:T(1,128)}', space=vmem, size = 0x12000, scoped, tag = 'internal scratch']
  %s0 = inlined_call_operand.vmem [shape: f32[8,32], index: 0, kind: input, shape index: {}]
  %s1 = inlined_call_operand.vmem [shape: u32[8,32], index: 1, kind: input, shape index: {}]
  %s2 = inlined_call_operand.vmem [shape: f32[8,48], index: 2, kind: input, shape index: {}]
  %s3 = inlined_call_operand.vmem [shape: u32[8,16], index: 3, kind: input, shape index: {}]
  %s4 = inlined_call_operand.hbm [shape: f32[8,32], index: 4, kind: output, shape index: {0}]
  %s5 = inlined_call_operand.vmem [shape: f32[8,48], index: 5, kind: output, shape index: {1}]
  %6 = xla_tuple %s4, %s5
  %s7 = sld [smem:[#allocation0]]
  $region34: #{dropout_forward.3} parent=0
    _
  %s9 = ssub.s32 1, %s7
  %s10 = scalar_select 0, %s9, %s7
  $region1: #{dropout_forward.3} parent=0
    #allocation2 [shape = 'u8[4096]{0}', space=vmem, size = 0x1000, scoped, tag = 'output window, operand 0, single buffered']
    #allocation3 [shape = 's32[1]{0}', space=sflag, size = 0x4, scoped, tag = 'scoped memory for dropout_forward.3']
    %11 = vsyncpa [#allocation3], 0
    // Predicated region
    $region2: #{dropout_forward.3} parent=1 // pred_check
      _
    $region3: #{dropout_forward.3} parent=1 // pred_check_branch
      %13 = sbr.rel (0) target = $region5
    $region4: #{dropout_forward.3} parent=1 // pred_region
      _
    $region5: #{dropout_forward.3} parent=1 // pred_fallthru
      _
    // Predicated region
    $region6: #{dropout_forward.3} parent=1 // pred_check
      _
    $region7: #{dropout_forward.3} parent=1 // pred_check_branch
      %15 = sbr.rel (0) target = $region9
    $region8: #{dropout_forward.3} parent=1 // pred_region
      _
    $region9: #{dropout_forward.3} parent=1 // pred_fallthru
      _
    // Predicated region
    $region10: #{dropout_forward.3} parent=1 // pred_check
      _
    $region11: #{dropout_forward.3} parent=1 // pred_check_branch
      %17 = sbr.rel (0) target = $region13
    $region12: #{dropout_forward.3} parent=1 // pred_region
      _
    $region13: #{dropout_forward.3} parent=1 // pred_fallthru
      _
    // Predicated region
    $region14: #{dropout_forward.3} parent=1 // pred_check
      _
    $region15: #{dropout_forward.3} parent=1 // pred_check_branch
      %19 = sbr.rel (0) target = $region17
    $region16: #{dropout_forward.3} parent=1 // pred_region
      _
    $region17: #{dropout_forward.3} parent=1 // pred_fallthru
      _
    %v20 = vld [vmem:[%s1] sm:$0xff]
    %v21 = vshrl.u32 %v20, 8
    %vm22 = vcmp.lt.u32.totalorder %v21, 13421772
    %v23 = vsel %vm22, 1.25, 0.0
    %v24 = vld [vmem:[%s0] sm:$0xff]
    %v25 = vmul.f32 %v24, %v23
    %vm26 = vcmask 261120
    %27 = vst.msk [vmem:[#allocation2] sm:$0xff] %vm26, %v25
    %v28 = vld [vmem:[%s3] sm:$0xff]
    %v29 = vshrl.u32 %v28, 8
    %vm30 = vcmp.lt.u32.totalorder %v29, 13421772
    %v31 = vsel %vm30, 1.25, 0.0
    %v32 = vlaneseq
    %v33 = vshrl.u32 %v32, 7
    %v34 = vsub.s32 0, %v33
    %v35 = vrot.slane %v31, %v34
    %37 = vbcast.lane.b32.xlu0 %v35, 256
    %v38 = vpop.permute.xlu0 %37
    %s40 = sor.u32 256, 8
    %41 = vbcast.lane.b32.xlu0 %v35, %s40
    %v42 = vpop.permute.xlu0 %41
    %v43 = vlaneseq
    %v44 = vshrl.u32 %v43, 7
    %v45 = vsub.s32 1, %v44
    %v46 = vrot.slane %v31, %v45
    %48 = vbcast.lane.b32.xlu0 %v46, 256
    %v49 = vpop.permute.xlu0 %48
    %s51 = sor.u32 256, 8
    %52 = vbcast.lane.b32.xlu0 %v46, %s51
    %v53 = vpop.permute.xlu0 %52
    %v54 = vlaneseq
    %v55 = vshrl.u32 %v54, 7
    %v56 = vsub.s32 2, %v55
    %v57 = vrot.slane %v31, %v56
    %59 = vbcast.lane.b32.xlu0 %v57, 256
    %v60 = vpop.permute.xlu0 %59
    %s62 = sor.u32 256, 8
    %63 = vbcast.lane.b32.xlu0 %v57, %s62
    %v64 = vpop.permute.xlu0 %63
    %v65 = vlaneseq
    %v66 = vshrl.u32 %v65, 7
    %v67 = vsub.s32 3, %v66
    %v68 = vrot.slane %v31, %v67
    %70 = vbcast.lane.b32.xlu0 %v68, 256
    %v71 = vpop.permute.xlu0 %70
    %s73 = sor.u32 256, 8
    %74 = vbcast.lane.b32.xlu0 %v68, %s73
    %v75 = vpop.permute.xlu0 %74
    %v76 = vlaneseq
    %v77 = vshrl.u32 %v76, 7
    %v78 = vsub.s32 4, %v77
    %v79 = vrot.slane %v31, %v78
    %81 = vbcast.lane.b32.xlu0 %v79, 256
    %v82 = vpop.permute.xlu0 %81
    %s84 = sor.u32 256, 8
    %85 = vbcast.lane.b32.xlu0 %v79, %s84
    %v86 = vpop.permute.xlu0 %85
    %v87 = vlaneseq
    %v88 = vshrl.u32 %v87, 7
    %v89 = vsub.s32 5, %v88
    %v90 = vrot.slane %v31, %v89
    %92 = vbcast.lane.b32.xlu0 %v90, 256
    %v93 = vpop.permute.xlu0 %92
    %s95 = sor.u32 256, 8
    %96 = vbcast.lane.b32.xlu0 %v90, %s95
    %v97 = vpop.permute.xlu0 %96
    %v98 = vlaneseq
    %v99 = vshrl.u32 %v98, 7
    %v100 = vsub.s32 6, %v99
    %v101 = vrot.slane %v31, %v100
    %103 = vbcast.lane.b32.xlu0 %v101, 256
    %v104 = vpop.permute.xlu0 %103
    %s106 = sor.u32 256, 8
    %107 = vbcast.lane.b32.xlu0 %v101, %s106
    %v108 = vpop.permute.xlu0 %107
    %v109 = vlaneseq
    %v110 = vshrl.u32 %v109, 7
    %v111 = vsub.s32 7, %v110
    %v112 = vrot.slane %v31, %v111
    %114 = vbcast.lane.b32.xlu0 %v112, 256
    %v115 = vpop.permute.xlu0 %114
    %s117 = sor.u32 256, 8
    %118 = vbcast.lane.b32.xlu0 %v112, %s117
    %v119 = vpop.permute.xlu0 %118
    %v120 = vcombine.low %v38, %v60
    %v121 = vcombine.high %v38, %v60
    %v123 = vunpack.c.l.s4 1983009808
    %v124 = vunpack.c.0.s8 %v123
    %v125 = vlaneseq
    %v126 = vshrl.u32 %v125, 7
    %v127 = vsub.s32 %v124, %v126
    %v128 = vrot.slane %v120, %v127
    %v130 = vunpack.c.l.s4 1983009808
    %v131 = vunpack.c.0.s8 %v130
    %v132 = vlaneseq
    %v133 = vshrl.u32 %v132, 7
    %v134 = vsub.s32 %v131, %v133
    %v135 = vrot.slane %v121, %v134
    %v136 = vcombine.low %v49, %v71
    %v137 = vcombine.high %v49, %v71
    %v139 = vunpack.c.l.s4 1983009808
    %v140 = vunpack.c.0.s8 %v139
    %v141 = vlaneseq
    %v142 = vshrl.u32 %v141, 7
    %v143 = vsub.s32 %v140, %v142
    %v144 = vrot.slane %v136, %v143
    %v146 = vunpack.c.l.s4 1983009808
    %v147 = vunpack.c.0.s8 %v146
    %v148 = vlaneseq
    %v149 = vshrl.u32 %v148, 7
    %v150 = vsub.s32 %v147, %v149
    %v151 = vrot.slane %v137, %v150
    %v152 = vcombine.low %v82, %v104
    %v153 = vcombine.high %v82, %v104
    %v155 = vunpack.c.l.s4 1983009808
    %v156 = vunpack.c.0.s8 %v155
    %v157 = vlaneseq
    %v158 = vshrl.u32 %v157, 7
    %v159 = vsub.s32 %v156, %v158
    %v160 = vrot.slane %v152, %v159
    %v162 = vunpack.c.l.s4 1983009808
    %v163 = vunpack.c.0.s8 %v162
    %v164 = vlaneseq
    %v165 = vshrl.u32 %v164, 7
    %v166 = vsub.s32 %v163, %v165
    %v167 = vrot.slane %v153, %v166
    %v168 = vcombine.low %v93, %v115
    %v169 = vcombine.high %v93, %v115
    %v171 = vunpack.c.l.s4 1983009808
    %v172 = vunpack.c.0.s8 %v171
    %v173 = vlaneseq
    %v174 = vshrl.u32 %v173, 7
    %v175 = vsub.s32 %v172, %v174
    %v176 = vrot.slane %v168, %v175
    %v178 = vunpack.c.l.s4 1983009808
    %v179 = vunpack.c.0.s8 %v178
    %v180 = vlaneseq
    %v181 = vshrl.u32 %v180, 7
    %v182 = vsub.s32 %v179, %v181
    %v183 = vrot.slane %v169, %v182
    %v184 = vcombine.low %v128, %v144
    %v185 = vcombine.high %v128, %v144
    %v187 = vunpack.c.l.s4 1934713408
    %v188 = vunpack.c.0.s8 %v187
    %v189 = vlaneseq
    %v190 = vshrl.u32 %v189, 7
    %v191 = vsub.s32 %v188, %v190
    %v192 = vrot.slane %v184, %v191
    %v194 = vunpack.c.l.s4 1934713408
    %v195 = vunpack.c.0.s8 %v194
    %v196 = vlaneseq
    %v197 = vshrl.u32 %v196, 7
    %v198 = vsub.s32 %v195, %v197
    %v199 = vrot.slane %v185, %v198
    %v200 = vcombine.low %v135, %v151
    %v201 = vcombine.high %v135, %v151
    %v203 = vunpack.c.l.s4 1934713408
    %v204 = vunpack.c.0.s8 %v203
    %v205 = vlaneseq
    %v206 = vshrl.u32 %v205, 7
    %v207 = vsub.s32 %v204, %v206
    %v208 = vrot.slane %v200, %v207
    %v210 = vunpack.c.l.s4 1934713408
    %v211 = vunpack.c.0.s8 %v210
    %v212 = vlaneseq
    %v213 = vshrl.u32 %v212, 7
    %v214 = vsub.s32 %v211, %v213
    %v215 = vrot.slane %v201, %v214
    %v216 = vcombine.low %v160, %v176
    %v217 = vcombine.high %v160, %v176
    %v219 = vunpack.c.l.s4 1934713408
    %v220 = vunpack.c.0.s8 %v219
    %v221 = vlaneseq
    %v222 = vshrl.u32 %v221, 7
    %v223 = vsub.s32 %v220, %v222
    %v224 = vrot.slane %v216, %v223
    %v226 = vunpack.c.l.s4 1934713408
    %v227 = vunpack.c.0.s8 %v226
    %v228 = vlaneseq
    %v229 = vshrl.u32 %v228, 7
    %v230 = vsub.s32 %v227, %v229
    %v231 = vrot.slane %v217, %v230
    %v232 = vcombine.low %v167, %v183
    %v233 = vcombine.high %v167, %v183
    %v235 = vunpack.c.l.s4 1934713408
    %v236 = vunpack.c.0.s8 %v235
    %v237 = vlaneseq
    %v238 = vshrl.u32 %v237, 7
    %v239 = vsub.s32 %v236, %v238
    %v240 = vrot.slane %v232, %v239
    %v242 = vunpack.c.l.s4 1934713408
    %v243 = vunpack.c.0.s8 %v242
    %v244 = vlaneseq
    %v245 = vshrl.u32 %v244, 7
    %v246 = vsub.s32 %v243, %v245
    %v247 = vrot.slane %v233, %v246
    %v248 = vcombine.low %v192, %v224
    %v249 = vcombine.high %v192, %v224
    %v250 = vcombine.low %v199, %v231
    %v251 = vcombine.high %v199, %v231
    %v252 = vcombine.low %v208, %v240
    %v253 = vcombine.high %v208, %v240
    %v254 = vcombine.low %v215, %v247
    %v255 = vcombine.high %v215, %v247
    %v256 = vcombine.low %v42, %v64
    %v257 = vcombine.high %v42, %v64
    %v259 = vunpack.c.l.s4 1983009808
    %v260 = vunpack.c.0.s8 %v259
    %v261 = vlaneseq
    %v262 = vshrl.u32 %v261, 7
    %v263 = vsub.s32 %v260, %v262
    %v264 = vrot.slane %v256, %v263
    %v266 = vunpack.c.l.s4 1983009808
    %v267 = vunpack.c.0.s8 %v266
    %v268 = vlaneseq
    %v269 = vshrl.u32 %v268, 7
    %v270 = vsub.s32 %v267, %v269
    %v271 = vrot.slane %v257, %v270
    %v272 = vcombine.low %v53, %v75
    %v273 = vcombine.high %v53, %v75
    %v275 = vunpack.c.l.s4 1983009808
    %v276 = vunpack.c.0.s8 %v275
    %v277 = vlaneseq
    %v278 = vshrl.u32 %v277, 7
    %v279 = vsub.s32 %v276, %v278
    %v280 = vrot.slane %v272, %v279
    %v282 = vunpack.c.l.s4 1983009808
    %v283 = vunpack.c.0.s8 %v282
    %v284 = vlaneseq
    %v285 = vshrl.u32 %v284, 7
    %v286 = vsub.s32 %v283, %v285
    %v287 = vrot.slane %v273, %v286
    %v288 = vcombine.low %v86, %v108
    %v289 = vcombine.high %v86, %v108
    %v291 = vunpack.c.l.s4 1983009808
    %v292 = vunpack.c.0.s8 %v291
    %v293 = vlaneseq
    %v294 = vshrl.u32 %v293, 7
    %v295 = vsub.s32 %v292, %v294
    %v296 = vrot.slane %v288, %v295
    %v298 = vunpack.c.l.s4 1983009808
    %v299 = vunpack.c.0.s8 %v298
    %v300 = vlaneseq
    %v301 = vshrl.u32 %v300, 7
    %v302 = vsub.s32 %v299, %v301
    %v303 = vrot.slane %v289, %v302
    %v304 = vcombine.low %v97, %v119
    %v305 = vcombine.high %v97, %v119
    %v307 = vunpack.c.l.s4 1983009808
    %v308 = vunpack.c.0.s8 %v307
    %v309 = vlaneseq
    %v310 = vshrl.u32 %v309, 7
    %v311 = vsub.s32 %v308, %v310
    %v312 = vrot.slane %v304, %v311
    %v314 = vunpack.c.l.s4 1983009808
    %v315 = vunpack.c.0.s8 %v314
    %v316 = vlaneseq
    %v317 = vshrl.u32 %v316, 7
    %v318 = vsub.s32 %v315, %v317
    %v319 = vrot.slane %v305, %v318
    %v320 = vcombine.low %v264, %v280
    %v321 = vcombine.high %v264, %v280
    %v323 = vunpack.c.l.s4 1934713408
    %v324 = vunpack.c.0.s8 %v323
    %v325 = vlaneseq
    %v326 = vshrl.u32 %v325, 7
    %v327 = vsub.s32 %v324, %v326
    %v328 = vrot.slane %v320, %v327
    %v330 = vunpack.c.l.s4 1934713408
    %v331 = vunpack.c.0.s8 %v330
    %v332 = vlaneseq
    %v333 = vshrl.u32 %v332, 7
    %v334 = vsub.s32 %v331, %v333
    %v335 = vrot.slane %v321, %v334
    %v336 = vcombine.low %v271, %v287
    %v337 = vcombine.high %v271, %v287
    %v339 = vunpack.c.l.s4 1934713408
    %v340 = vunpack.c.0.s8 %v339
    %v341 = vlaneseq
    %v342 = vshrl.u32 %v341, 7
    %v343 = vsub.s32 %v340, %v342
    %v344 = vrot.slane %v336, %v343
    %v346 = vunpack.c.l.s4 1934713408
    %v347 = vunpack.c.0.s8 %v346
    %v348 = vlaneseq
    %v349 = vshrl.u32 %v348, 7
    %v350 = vsub.s32 %v347, %v349
    %v351 = vrot.slane %v337, %v350
    %v352 = vcombine.low %v296, %v312
    %v353 = vcombine.high %v296, %v312
    %v355 = vunpack.c.l.s4 1934713408
    %v356 = vunpack.c.0.s8 %v355
    %v357 = vlaneseq
    %v358 = vshrl.u32 %v357, 7
    %v359 = vsub.s32 %v356, %v358
    %v360 = vrot.slane %v352, %v359
    %v362 = vunpack.c.l.s4 1934713408
    %v363 = vunpack.c.0.s8 %v362
    %v364 = vlaneseq
    %v365 = vshrl.u32 %v364, 7
    %v366 = vsub.s32 %v363, %v365
    %v367 = vrot.slane %v353, %v366
    %v368 = vcombine.low %v303, %v319
    %v369 = vcombine.high %v303, %v319
    %v371 = vunpack.c.l.s4 1934713408
    %v372 = vunpack.c.0.s8 %v371
    %v373 = vlaneseq
    %v374 = vshrl.u32 %v373, 7
    %v375 = vsub.s32 %v372, %v374
    %v376 = vrot.slane %v368, %v375
    %v378 = vunpack.c.l.s4 1934713408
    %v379 = vunpack.c.0.s8 %v378
    %v380 = vlaneseq
    %v381 = vshrl.u32 %v380, 7
    %v382 = vsub.s32 %v379, %v381
    %v383 = vrot.slane %v369, %v382
    %v384 = vcombine.low %v328, %v360
    %v385 = vcombine.high %v328, %v360
    %v386 = vcombine.low %v335, %v367
    %v387 = vcombine.high %v335, %v367
    %v388 = vcombine.low %v344, %v376
    %v389 = vcombine.high %v344, %v376
    %v390 = vcombine.low %v351, %v383
    %v391 = vcombine.high %v351, %v383
    %393 = vrot.lane.b32.xlu0 %v249, 3
    %v394 = vpop.permute.xlu0 %393
    %397 = vrot.lane.b32.xlu0 %v250, 6
    %v398 = vpop.permute.xlu0 %397
    %401 = vrot.lane.b32.xlu0 %v251, 9
    %v402 = vpop.permute.xlu0 %401
    %405 = vrot.lane.b32.xlu0 %v252, 12
    %v406 = vpop.permute.xlu0 %405
    %409 = vrot.lane.b32.xlu0 %v253, 15
    %v410 = vpop.permute.xlu0 %409
    %413 = vrot.lane.b32.xlu0 %v254, 18
    %v414 = vpop.permute.xlu0 %413
    %417 = vrot.lane.b32.xlu0 %v255, 21
    %v418 = vpop.permute.xlu0 %417
    %421 = vrot.lane.b32.xlu0 %v384, 24
    %v422 = vpop.permute.xlu0 %421
    %425 = vrot.lane.b32.xlu0 %v385, 27
    %v426 = vpop.permute.xlu0 %425
    %429 = vrot.lane.b32.xlu0 %v386, 30
    %v430 = vpop.permute.xlu0 %429
    %433 = vrot.lane.b32.xlu0 %v387, 33
    %v434 = vpop.permute.xlu0 %433
    %437 = vrot.lane.b32.xlu0 %v388, 36
    %v438 = vpop.permute.xlu0 %437
    %441 = vrot.lane.b32.xlu0 %v389, 39
    %v442 = vpop.permute.xlu0 %441
    %445 = vrot.lane.b32.xlu0 %v390, 42
    %v446 = vpop.permute.xlu0 %445
    %449 = vrot.lane.b32.xlu0 %v391, 45
    %v450 = vpop.permute.xlu0 %449
    %vm452 = vcmask 23552
    %v453 = vsel %vm452, %v248, %v394
    %vm454 = vcmask 48128
    %v455 = vsel %vm454, %v453, %v398
    %vm456 = vcmask 72704
    %v457 = vsel %vm456, %v455, %v402
    %vm458 = vcmask 97280
    %v459 = vsel %vm458, %v457, %v406
    %vm460 = vcmask 121856
    %v461 = vsel %vm460, %v459, %v410
    %vm462 = vcmask 146432
    %v463 = vsel %vm462, %v461, %v414
    %vm464 = vcmask 171008
    %v465 = vsel %vm464, %v463, %v418
    %vm466 = vcmask 195584
    %v467 = vsel %vm466, %v465, %v422
    %vm468 = vcmask 220160
    %v469 = vsel %vm468, %v467, %v426
    %vm470 = vcmask 244736
    %v471 = vsel %vm470, %v469, %v430
    %vm472 = vcmask 269312
    %v473 = vsel %vm472, %v471, %v434
    %vm474 = vcmask 293888
    %v475 = vsel %vm474, %v473, %v438
    %vm476 = vcmask 318464
    %v477 = vsel %vm476, %v475, %v442
    %vm478 = vcmask 343040
    %v479 = vsel %vm478, %v477, %v446
    %vm480 = vcmask 367616
    %v481 = vsel %vm480, %v479, %v450
    %v482 = vld [vmem:[%s2] sm:$0xff]
    %v483 = vmul.f32 %v482, %v481
    %vm484 = vcmask 392192
    %485 = vst.msk [vmem:[%s5] sm:$0xff] %vm484, %v483
    // Predicated region
    $region18: #{dropout_forward.3} parent=1 // pred_check
      _
    $region19: #{dropout_forward.3} parent=1 // pred_check_branch
      %487 = sbr.rel (0) target = $region21
    $region20: #{dropout_forward.3} parent=1 // pred_region
      %s489 = ssub.s32 128, 128
      %490 = vsyncadd [#allocation3], %s489
      %s492 = sshll.u32 [#allocation2], 4
      %s493 = int_to_ptr.vmem [resolvable:$true] %s492
      %495 = dma.vmem_to_hbm [thread:$0]  %s493, 128, %s4, [#allocation3]
    $region21: #{dropout_forward.3} parent=1 // pred_fallthru
      _
    // Predicated region
    $region22: #{dropout_forward.3} parent=1 // pred_check
      _
    $region23: #{dropout_forward.3} parent=1 // pred_check_branch
      %497 = sbr.rel (0) target = $region25
    $region24: #{dropout_forward.3} parent=1 // pred_region
      _
    $region25: #{dropout_forward.3} parent=1 // pred_fallthru
      _
    // Predicated region
    $region26: #{dropout_forward.3} parent=1 // pred_check
      _
    $region27: #{dropout_forward.3} parent=1 // pred_check_branch
      %499 = sbr.rel (0) target = $region29
    $region28: #{dropout_forward.3} parent=1 // pred_region
      %500 = dma.done [#allocation3], 128
    $region29: #{dropout_forward.3} parent=1 // pred_fallthru
      _
    // Predicated region
    $region30: #{dropout_forward.3} parent=1 // pred_check
      _
    $region31: #{dropout_forward.3} parent=1 // pred_check_branch
      %502 = sbr.rel (0) target = $region33
    $region32: #{dropout_forward.3} parent=1 // pred_region
      _
    $region33: #{dropout_forward.3} parent=1 // pred_fallthru
      _
    %503 = vsyncpa [#allocation3], 1

</llo_original>
